<compile_context>
chip_gen: v6e
topology: v6e:2x2x1
jax: 0.10.0
libtpu: 0.0.40
codegen_flags: <defaults>
</compile_context>

<pallas_src>
import functools
import math

import jax
import jax.numpy as jnp
import numpy as np
from jax.experimental import pallas as pl
from jax.experimental.pallas import tpu as pltpu


def _cdiv(a, b):
    return -(-a // b)


_SMALL_N = 4096  # below this, a fused jnp expression beats the kernel fixed cost


def _choose_tiles(n, itemsize):
    """Pick (tn, rows, tm) for a flattened element count n (lane-dense 2D layout)."""
    # Lane width: prefer a tn that divides n exactly (no pad / no trailing slice).
    tn = None
    for cand in (1024, 512, 256, 128):
        if n % cand == 0:
            tn = cand
            break
    if tn is None:
        tn = 1024 if n >= 1024 else _cdiv(n, 128) * 128
    rows = _cdiv(n, tn)

    if rows <= 8:
        # Single block spanning all rows ("equal to full array dim" satisfies
        # the (8,128) block rule even when rows is not a multiple of 8).
        return tn, rows, rows

    # Row tile: multiple of 8, ~4 MiB per block (double-buffered in+out stays
    # well inside scoped VMEM on v5e/v6e/v7x with the explicit limit below).
    tm_cap = max(8, ((4 << 20) // (tn * itemsize)) // 8 * 8)
    tm = min(tm_cap, _cdiv(rows, 8) * 8)
    # Target >= 4 grid steps for large inputs: >= 2 tiles per v7x TensorCore,
    # hides pipeline prologue/epilogue and balances the cores.
    if rows >= 32:
        tm = min(tm, max(8, _cdiv(_cdiv(rows, 4), 8) * 8))
    return tn, rows, max(8, tm)


def _make_cosine_cutoff_kernel(cutoff):
    cutoff_f = np.float32(cutoff)
    scale = np.float32(np.pi / float(cutoff))  # baked trace-time constant

    def kernel(d_ref, o_ref):
        d = d_ref[...].astype(jnp.float32)          # widen on the vreg (free-ish)
        c = 0.5 * jnp.cos(d * scale) + 0.5
        # Multiply (not jnp.where) so NaN distances propagate like the reference.
        mask = (d < cutoff_f).astype(jnp.float32)
        o_ref[...] = (c * mask).astype(o_ref.dtype)

    return kernel


@functools.partial(jax.jit, static_argnames=("cutoff",))
def _cosine_cutoff_pallas_impl(distances, cutoff):
    orig_shape = distances.shape
    dtype = distances.dtype
    n = math.prod(orig_shape) if orig_shape else 1

    tn, rows, tm = _choose_tiles(n, dtype.itemsize)
    padded = rows * tn

    flat = distances.reshape(-1)
    if padded > n:                       # pad only to a multiple of tn, only if needed
        flat = jnp.pad(flat, (0, padded - n))
    x2d = flat.reshape(rows, tn)

    grid = (_cdiv(rows, tm),)            # ragged last row-tile is masked by Pallas

    out2d = pl.pallas_call(
        _make_cosine_cutoff_kernel(cutoff),
        out_shape=jax.ShapeDtypeStruct((rows, tn), dtype),
        grid_spec=pltpu.PrefetchScalarGridSpec(
            num_scalar_prefetch=0,
            grid=grid,
            in_specs=[pl.BlockSpec((tm, tn), lambda i: (i, 0))],
            out_specs=pl.BlockSpec((tm, tn), lambda i: (i, 0)),
        ),
        compiler_params=pltpu.CompilerParams(
            dimension_semantics=("parallel",),
            vmem_limit_bytes=32 * 1024 * 1024,
        ),
    )(x2d)

    out = out2d.reshape(-1)
    if padded > n:                       # slice only when padding was added
        out = out[:n]
    return out.reshape(orig_shape)


@functools.partial(jax.jit, static_argnames=("cutoff",))
def _cosine_cutoff_fused(distances, cutoff):
    """Small-input fast path: single fused XLA elementwise pass."""
    d = distances.astype(jnp.float32)
    c = 0.5 * jnp.cos(d * jnp.float32(np.pi / cutoff)) + 0.5
    return (c * (d < jnp.float32(cutoff)).astype(jnp.float32)).astype(distances.dtype)


def cosine_cutoff_pallas(distances, cutoff=5.0, *, force_pallas=False):
    """Pallas equivalent of schnetpack cosine_cutoff.

    distances: floating array of shape (Nbatch, Nat, Nneigh) (any shape works).
    cutoff:    python float (cutoff radius).
    """
    distances = jnp.asarray(distances)
    if not jnp.issubdtype(distances.dtype, jnp.floating):
        distances = distances.astype(jnp.float32)
    n = math.prod(distances.shape) if distances.shape else 1
    if n < _SMALL_N and not force_pallas:
        return _cosine_cutoff_fused(distances, float(cutoff))
    return _cosine_cutoff_pallas_impl(distances, float(cutoff))


class CosineCutoff:
    """Module-style wrapper mirroring schnetpack.nn.cutoff.CosineCutoff."""

    def __init__(self, cutoff=5.0):
        self.cutoff = float(cutoff)

    def __call__(self, distances):
        return cosine_cutoff_pallas(distances, cutoff=self.cutoff)


def cosine_cutoff_ref(distances, cutoff=5.0):
    """Pure-JAX reference matching the PyTorch semantics (f32)."""
    d = jnp.asarray(distances, dtype=jnp.float32)
    c = 0.5 * (jnp.cos(d * np.float32(np.pi) / np.float32(cutoff)) + 1.0)
    return c * (d < cutoff).astype(jnp.float32)


if __name__ == "__main__":
    key = jax.random.PRNGKey(0)
    k1, k2, k3, k4 = jax.random.split(key, 4)

    # (Nbatch, Nat, Nneigh); distances in [0, 8) so some exceed cutoff=5.0.
    d_small = jax.random.uniform(k1, (2, 8, 16), jnp.float32, 0.0, 8.0)
    out = jax.block_until_ready(cosine_cutoff_pallas(d_small, 5.0, force_pallas=True))
    np.testing.assert_allclose(
        np.asarray(out), np.asarray(cosine_cutoff_ref(d_small, 5.0)),
        rtol=1e-5, atol=1e-5)

    # Ragged flattened size (n not a multiple of 128) -> exercises pad + slice path.
    d_ragged = jax.random.uniform(k2, (3, 17, 29), jnp.float32, 0.0, 8.0)
    out = jax.block_until_ready(cosine_cutoff_pallas(d_ragged, 5.0, force_pallas=True))
    np.testing.assert_allclose(
        np.asarray(out), np.asarray(cosine_cutoff_ref(d_ragged, 5.0)),
        rtol=1e-5, atol=1e-5)

    # Multi-step grid (4 row-tiles), no padding needed.
    d_big = jax.random.uniform(k3, (8, 64, 128), jnp.float32, 0.0, 8.0)
    out = jax.block_until_ready(cosine_cutoff_pallas(d_big, 5.0))
    np.testing.assert_allclose(
        np.asarray(out), np.asarray(cosine_cutoff_ref(d_big, 5.0)),
        rtol=1e-5, atol=1e-5)

    # Native-dtype (bf16) I/O: f32 compute on-chip, bf16 in HBM both ways.
    d_bf16 = jax.random.uniform(k4, (4, 32, 48), jnp.float32, 0.0, 8.0).astype(jnp.bfloat16)
    out_bf16 = jax.block_until_ready(cosine_cutoff_pallas(d_bf16, 5.0, force_pallas=True))
    assert out_bf16.dtype == jnp.bfloat16
    ref_bf16 = cosine_cutoff_ref(d_bf16.astype(jnp.float32), 5.0)
    np.testing.assert_allclose(
        np.asarray(out_bf16.astype(jnp.float32)), np.asarray(ref_bf16),
        rtol=0.0, atol=1e-2)

    # Small-input fused fast path (no pallas_call).
    out_fast = jax.block_until_ready(cosine_cutoff_pallas(d_small, 5.0))
    np.testing.assert_allclose(
        np.asarray(out_fast), np.asarray(cosine_cutoff_ref(d_small, 5.0)),
        rtol=1e-5, atol=1e-5)

    print("KERNEL_OK")
</pallas_src>

<mosaic_0001>
module attributes {stable_mosaic.version = 11 : i64} {
  func.func @kernel(%arg0: i32, %arg1: memref<1x256xf32, #tpu.memory_space<vmem>>, %arg2: memref<1x256xf32, #tpu.memory_space<vmem>>) attributes {dimension_semantics = [#tpu.dimension_semantics<parallel>], iteration_bounds = array<i64: 1>, scalar_prefetch = 0 : i64, scratch_operands = 0 : i64, tpu.core_type = #tpu.core_type<tc>, window_params = [{transform_indices = @transform_0, window_bounds = array<i64: 1, 256>}, {transform_indices = @transform_1, window_bounds = array<i64: 1, 256>}]} {
    %c0 = arith.constant 0 : index
    %c0_0 = arith.constant 0 : index
    %0 = vector.load %arg1[%c0, %c0_0] : memref<1x256xf32, #tpu.memory_space<vmem>>, vector<1x256xf32>
    %cst = arith.constant 0.628318548 : f32
    %1 = vector.broadcast %cst : f32 to vector<1x256xf32>
    %2 = arith.mulf %0, %1 : vector<1x256xf32>
    %3 = math.cos %2 : vector<1x256xf32>
    %cst_1 = arith.constant 5.000000e-01 : f32
    %4 = vector.broadcast %cst_1 : f32 to vector<1x256xf32>
    %5 = arith.mulf %4, %3 : vector<1x256xf32>
    %cst_2 = arith.constant 5.000000e-01 : f32
    %6 = vector.broadcast %cst_2 : f32 to vector<1x256xf32>
    %7 = arith.addf %5, %6 : vector<1x256xf32>
    %cst_3 = arith.constant 5.000000e+00 : f32
    %8 = vector.broadcast %cst_3 : f32 to vector<1x256xf32>
    %9 = arith.cmpf olt, %0, %8 : vector<1x256xf32>
    %10 = arith.extui %9 : vector<1x256xi1> to vector<1x256xi32>
    %11 = arith.sitofp %10 : vector<1x256xi32> to vector<1x256xf32>
    %12 = arith.mulf %7, %11 : vector<1x256xf32>
    %c0_4 = arith.constant 0 : index
    %c0_5 = arith.constant 0 : index
    %13 = vector.load %arg2[%c0_4, %c0_5] : memref<1x256xf32, #tpu.memory_space<vmem>>, vector<1x256xf32>
    tpu.vector_store %arg2[%c0_4, %c0_5], %12 {strides = array<i32>} : memref<1x256xf32, #tpu.memory_space<vmem>>, vector<1x256xf32>,
    return
  }
  func.func @transform_0(%arg0: i32) -> (i32, i32) {
    %c0_i32 = arith.constant 0 : i32
    %c0_i32_0 = arith.constant 0 : i32
    return %arg0, %c0_i32 : i32, i32
  }
  func.func @transform_1(%arg0: i32) -> (i32, i32) {
    %c0_i32 = arith.constant 0 : i32
    %c0_i32_0 = arith.constant 0 : i32
    return %arg0, %c0_i32 : i32, i32
  }
}

</mosaic_0001>

<llo_original>
// kernel: _cosine_cutoff_pallas_impl.1
$region0: #{_cosine_cutoff_pallas_impl.1}
  #allocation0 [shape = 'u32[]', space=smem, size = 0x4, offset = 0x4, fixed_abs, tag = 'smem constant byte address 0x4 - core index']
  #allocation1 [shape = 'u32[144,128]{1,0:T(1,128)}', space=vmem, size = 0x12000, scoped, tag = 'internal scratch']
  %s0 = inlined_call_operand.vmem [shape: f32[1,256], index: 0, kind: input, shape index: {}]
  %s1 = inlined_call_operand.vmem [shape: f32[1,256], index: 1, kind: output, shape index: {}]
  %s2 = sld [smem:[#allocation0]]
  $region14: #{_cosine_cutoff_pallas_impl.1} parent=0
    _
  %s4 = ssub.s32 1, %s2
  %s5 = scalar_select 0, %s4, %s2
  // Predicated region
  $region2: #{_cosine_cutoff_pallas_impl.1} parent=0 // pred_check
    _
  $region3: #{_cosine_cutoff_pallas_impl.1} parent=0 // pred_check_branch
    %7 = sbr.rel (0) target = $region5
  $region4: #{_cosine_cutoff_pallas_impl.1} parent=0 // pred_region
    _
  $region5: #{_cosine_cutoff_pallas_impl.1} parent=0 // pred_fallthru
    _
  %v8 = vld [vmem:[%s0] sm:$0x3]
  %v9 = vmul.f32 %v8, 0.62831855
  %v10 = vand.u32 2147483647, %v9
  %vm11 = vcmp.le.f32.partialorder %v10, 0.7853982
  %vm12 = vcmp.lt.s32.totalorder %v9, 0
  %v13 = vand.u32 %v9, 2139095040
  %v14 = vshrl.u32 %v13, 23
  %v15 = vsub.s32 %v14, 127
  %v16 = vand.u32 2147483647, %v9
  %v17 = vand.u32 %v16, 8388607
  %v18 = vor.u32 %v17, 8388608
  %v19 = vsub.s32 0, %v18
  %v20 = vadd.s32 %v15, 1
  %vm21 = vcmp.gt.s32.totalorder %v20, 0
  %v22 = vsel %vm21, %v20, 0
  %v23 = vshrl.u32 %v22, 5
  %v24 = vand.u32 %v22, 31
  %v25 = vsub.s32 32, %v24
  %v26 = vshrl.u32 683565275, %v25
  %v27 = vshll.u32 683565275, %v24
  %v28 = vshrl.u32 2475754826, %v25
  %v29 = vor.u32 %v27, %v28
  %v30 = vshll.u32 2475754826, %v24
  %v31 = vshrl.u32 2131351028, %v25
  %v32 = vor.u32 %v30, %v31
  %v33 = vshll.u32 2131351028, %v24
  %v34 = vshrl.u32 2102212464, %v25
  %v35 = vor.u32 %v33, %v34
  %v36 = vshll.u32 2102212464, %v24
  %v37 = vshrl.u32 920167782, %v25
  %v38 = vor.u32 %v36, %v37
  %v39 = vshll.u32 920167782, %v24
  %v40 = vshrl.u32 1326507024, %v25
  %v41 = vor.u32 %v39, %v40
  %vm42 = vcmp.lt.s32.totalorder %v23, 1
  %vm43 = vcmp.lt.s32.totalorder %v23, 2
  %vm44 = vcmp.lt.s32.totalorder %v23, 3
  %vm45 = vcmp.lt.s32.totalorder %v23, 4
  %v46 = vsel %vm42, %v26, %v29
  %v47 = vsel %vm45, %v35, 2102212464
  %v48 = vsel %vm44, %v32, %v47
  %v49 = vsel %vm43, %v46, %v48
  %v50 = vsel %vm42, %v29, %v32
  %v51 = vsel %vm45, %v38, 920167782
  %v52 = vsel %vm44, %v35, %v51
  %v53 = vsel %vm43, %v50, %v52
  %v54 = vsel %vm42, %v32, %v35
  %v55 = vsel %vm45, %v41, 1326507024
  %v56 = vsel %vm44, %v38, %v55
  %v57 = vsel %vm43, %v54, %v56
  %v58 = vshll.u32 %v18, 8
  %v59 = vmul.u32.u64.compose %v58, %v57
  %v60 = vextract.low.u32 %v59
  %v61 = vextract.high.u32 %v59
  %v62 = vmul.u32.u64.compose %v58, %v53
  %v63 = vextract.low.u32 %v62
  %v64 = vextract.high.u32 %v62
  %v65 = vmul.u32 %v58, %v49
  %v66 = vadd.s32 %v61, %v63
  %vm67 = vc.u32 %v61, %v63
  %v68 = vadd.s32 %v64, 1
  %v69 = vsel %vm67, %v68, %v64
  %v70 = vadd.s32 %v65, %v69
  %v71 = vadd.s32 %v70, 536870912
  %v72 = vshrl.u32 %v71, 30
  %v73 = vshll.u32 %v72, 30
  %v74 = vsub.s32 %v70, %v73
  %vm75 = vcmp.lt.s32.totalorder %v74, 0
  %v76 = vsub.s32 0, %v74
  %v77 = vsel %vm75, %v76, %v74
  %v78 = vclz %v77
  %v79 = vsub.s32 %v78, 2
  %vm80 = vcmp.gt.s32.totalorder 0, %v79
  %v81 = vsel %vm80, 0, %v79
  %v82 = vsub.s32 32, %v81
  %v83 = vshll.u32 %v74, %v81
  %v84 = vshrl.u32 %v66, %v82
  %v85 = vor.u32 %v83, %v84
  %v86 = vsub.s32 4294967266, %v81
  %v87 = vadd.s32 %v86, 127
  %v88 = vshll.u32 %v87, 23
  %v89 = vor.u32 4788187, %v88
  %v90 = vand.u32 2147483647, %v89
  %v92 = vcvt.s32.f32 %v85
  %v93 = vmul.f32 %v92, %v90
  %v94 = vxor.u32 %v93, 2147483648
  %v95 = vsel %vm12, %v94, %v93
  %v96 = vsub.s32 4, %v72
  %v97 = vsel %vm12, %v96, %v72
  %v98 = vsel %vm11, %v9, %v95
  %v99 = vsel %vm11, 0, %v97
  %v100 = vcosq.f32.pop %v98
  %v101 = vsinq.f32.pop %v98
  %vm102 = vweird.f32 %v9
  %v103 = vand.u32 %v99, 3
  %vm104 = vcmp.lt.s32.totalorder %v103, 2
  %vm105 = vcmp.eq.s32.totalorder %v103, 0
  %v106 = vxor.u32 %v101, 2147483648
  %v107 = vsel %vm105, %v100, %v106
  %vm108 = vcmp.eq.s32.totalorder %v103, 2
  %v109 = vxor.u32 %v100, 2147483648
  %v110 = vsel %vm108, %v109, %v101
  %v111 = vsel %vm104, %v107, %v110
  %v112 = vsel %vm102, nan, %v111
  %v113 = vmul.f32 %v112, 0.5
  %v114 = vadd.f32 %v113, 0.5
  %vm115 = vcmp.lt.f32.partialorder %v8, 5.0
  %v116 = vsel %vm115, 1, 0
  %v117 = vcvt.s32.f32 %v116
  %v118 = vmul.f32 %v114, %v117
  %v119 = vlaneseq
  %vm120 = vcmp.ge.s32.totalorder %v119, 0
  %vm121 = vcmp.lt.s32.totalorder %v119, 256
  %vm122 = vmand %vm120, %vm121
  %123 = vst.msk [vmem:[%s1] sm:$0x3] %vm122, %v118
  // Predicated region
  $region6: #{_cosine_cutoff_pallas_impl.1} parent=0 // pred_check
    _
  $region7: #{_cosine_cutoff_pallas_impl.1} parent=0 // pred_check_branch
    %125 = sbr.rel (0) target = $region9
  $region8: #{_cosine_cutoff_pallas_impl.1} parent=0 // pred_region
    _
  $region9: #{_cosine_cutoff_pallas_impl.1} parent=0 // pred_fallthru
    _
  // Predicated region
  $region10: #{_cosine_cutoff_pallas_impl.1} parent=0 // pred_check
    _
  $region11: #{_cosine_cutoff_pallas_impl.1} parent=0 // pred_check_branch
    %127 = sbr.rel (0) target = $region13
  $region12: #{_cosine_cutoff_pallas_impl.1} parent=0 // pred_region
    _
  $region13: #{_cosine_cutoff_pallas_impl.1} parent=0 // pred_fallthru
    _

</llo_original>
